<compile_context>
chip_gen: v6e
topology: v6e:2x2x1
jax: 0.10.0
libtpu: 0.0.40
codegen_flags: <defaults>
</compile_context>

<pallas_src>
import functools

import jax
import jax.numpy as jnp
from jax.experimental import pallas as pl
from jax.experimental.pallas import tpu as pltpu


def _round_up(x, m):
    return (x + m - 1) // m * m


# --------------------------------------------------------------------------- #
# Kernel: fully fused prediction path, gridded over batch rows.
#   f   : (TM, D)    row tile of the input features
#   w   : (D, T)     fused fc_share -> fc[i] -> output[i] weight (VMEM-resident)
#   b   : (1, T)     fused bias (includes the batch-shared `d` term)
#   out : (TM, T)
# --------------------------------------------------------------------------- #
def _afse_fused_kernel(f_ref, w_ref, b_ref, o_ref, *, apply_sigmoid):
    y = jnp.dot(f_ref[...], w_ref[...],
                preferred_element_type=jnp.float32) + b_ref[...]
    if apply_sigmoid:
        # EUP reciprocal keeps the divide off the VPU slot.
        y = pl.reciprocal(1.0 + jnp.exp(-y), approx=True)
    o_ref[...] = y


# --------------------------------------------------------------------------- #
# Parameters: PyTorch __init__ layouts, then algebraically fused for the kernel
# (exact in eval mode: there is no nonlinearity anywhere in the chain).
# --------------------------------------------------------------------------- #
def init_afse_params(key, fingerprint_dim, output_units_num, scale=0.1):
    D, T = fingerprint_dim, output_units_num
    ks = iter(jax.random.split(key, 2 + 4 * T))
    w_share = jax.random.normal(next(ks), (D, 2 * D), jnp.float32) * scale   # (out, in)
    b_share = jax.random.normal(next(ks), (D,), jnp.float32) * scale
    w_fc = [jax.random.normal(next(ks), (D, D), jnp.float32) * scale for _ in range(T)]
    b_fc = [jax.random.normal(next(ks), (D,), jnp.float32) * scale for _ in range(T)]
    w_out = [jax.random.normal(next(ks), (1, D), jnp.float32) * scale for _ in range(T)]
    b_out = [jax.random.normal(next(ks), (1,), jnp.float32) * scale for _ in range(T)]

    # Per-task head fused into one (D, T) matrix: output[i](fc[i](h)) = h @ M[:, i] + c[i]
    M = jnp.stack([w_fc[i].T @ w_out[i][0] for i in range(T)], axis=1)           # (D, T)
    c = jnp.stack([b_fc[i] @ w_out[i][0] + b_out[i][0] for i in range(T)])       # (T,)

    # cat(feature, feature + d) folded into fc_share:
    #   h = feature @ (A + B)^T + d_row @ B^T + b_share,  A = Ws[:, :D], B = Ws[:, D:]
    A = w_share[:, :D]
    Bm = w_share[:, D:]
    W_full = (A + Bm).T @ M                                                      # (D, T)
    D_fold = Bm.T @ M                                                            # (D, T): d_row @ D_fold
    b_base = (b_share @ M + c)[None, :]                                          # (1, T)

    # conv_lr_average depends only on the weights -> compute ONCE here (plain JAX;
    # it is a 2-row probe, a pallas_call per forward would be pure launch overhead).
    u = jnp.concatenate(
        [jnp.concatenate([jnp.ones((1, D)), jnp.zeros((1, D))], axis=1),
         jnp.concatenate([jnp.zeros((1, D)), jnp.ones((1, D))], axis=1)], axis=0)  # (2, 2D)
    h = u @ w_share.T + b_share[None, :]
    aw = h @ M + c[None, :]                                                      # (2, T)
    aw1, aw2 = aw[0], aw[1]
    # torch.norm of a 1-element tensor is abs(.), so norm(.)**2 == (.)**2
    beta_afse = (24.0 * aw2 * aw2 / (aw1 + aw2)) ** 2
    beta_mse = (2.0 * (aw1 * aw1 + aw2 * aw2)) ** 2
    conv_lr_average = jnp.mean(1.0 / (beta_afse + beta_mse + 1e-9))

    return dict(
        D=D, T=T,
        # raw PyTorch-layout weights (kept for reference checking)
        w_share=w_share, b_share=b_share, w_fc=w_fc, b_fc=b_fc,
        w_out=w_out, b_out=b_out,
        # fused kernel operands
        W_full=W_full, W_full_bf16=W_full.astype(jnp.bfloat16),
        D_fold=D_fold, b_base=b_base,
        conv_lr_average=conv_lr_average,
    )


# --------------------------------------------------------------------------- #
# Forward pass
# --------------------------------------------------------------------------- #
def afse_forward(params, feature, d=0.0, *, output_lr=False, sigmoid=False,
                 row_tile=1024, use_bf16=False):
    D, T = params["D"], params["T"]
    B = feature.shape[0]

    # Fold the (batch-shared) `d` perturbation into the fused bias (tiny op).
    if isinstance(d, (int, float)) and d == 0:
        b_full = params["b_base"]
    else:
        d_arr = jnp.asarray(d, dtype=jnp.float32)
        if d_arr.ndim >= 2 and d_arr.shape[0] != 1:
            # TODO(synk): per-example d would need a per-row bias input to the kernel.
            raise NotImplementedError("per-example `d` is not supported by the fused kernel")
        d_row = jnp.broadcast_to(d_arr.reshape(1, -1), (1, D))
        b_full = params["b_base"] + d_row @ params["D_fold"]

    # bf16 only on the HBM-side matmul operands; accumulation / bias / sigmoid stay f32.
    in_dtype = jnp.bfloat16 if use_bf16 else jnp.float32
    x_in = feature if feature.dtype == in_dtype else feature.astype(in_dtype)
    w_in = params["W_full_bf16"] if use_bf16 else params["W_full"]

    # Batch row tiling: cdiv grid (no wrapper pad); ensure >= 2 grid steps when the
    # batch allows so a v7x megacore can shard the "parallel" axis over both TCs.
    tile = min(row_tile, _round_up(B, 8))
    if B >= 16 and pl.cdiv(B, tile) < 2:
        tile = _round_up(pl.cdiv(B, 2), 8)
    grid = (pl.cdiv(B, tile),)

    cost = pl.CostEstimate(
        flops=2 * B * D * T,
        transcendentals=(B * T) if sigmoid else 0,
        bytes_accessed=(B * D * x_in.dtype.itemsize
                        + D * T * w_in.dtype.itemsize
                        + T * 4 + B * T * 4),
    )

    kernel = functools.partial(_afse_fused_kernel, apply_sigmoid=sigmoid)
    mol_prediction = pl.pallas_call(
        kernel,
        out_shape=jax.ShapeDtypeStruct((B, T), jnp.float32),
        grid=grid,
        in_specs=[
            pl.BlockSpec((tile, D), lambda i: (i, 0)),   # feature row tile
            pl.BlockSpec((D, T), lambda i: (0, 0)),      # VMEM-resident fused weight
            pl.BlockSpec((1, T), lambda i: (0, 0)),      # VMEM-resident fused bias
        ],
        out_specs=pl.BlockSpec((tile, T), lambda i: (i, 0)),  # unpadded (B, T) output
        compiler_params=pltpu.CompilerParams(dimension_semantics=("parallel",)),
        cost_estimate=cost,
    )(x_in, w_in, b_full)

    if output_lr:
        return mol_prediction, params["conv_lr_average"]
    return mol_prediction


# --------------------------------------------------------------------------- #
if __name__ == "__main__":
    fingerprint_dim = 32        # D
    output_units_num = 3        # T (number of task heads)
    p_dropout = 0.1             # eval mode -> identity
    B = 4

    key = jax.random.PRNGKey(0)
    kp, kf = jax.random.split(key)
    params = init_afse_params(kp, fingerprint_dim, output_units_num)
    feature = jax.random.normal(kf, (B, fingerprint_dim), jnp.float32)

    # default path (f32), with conv_lr output
    pred, conv_lr_avg = afse_forward(params, feature, d=0.0,
                                     output_lr=True, sigmoid=False)
    jax.block_until_ready(pred)
    jax.block_until_ready(conv_lr_avg)
    assert pred.shape == (B, output_units_num)
    assert conv_lr_avg.shape == ()

    # unfused pure-JAX reference (eval mode) to sanity-check the fused algebra
    def ref_forward(f, d):
        x = jnp.concatenate([f, f + d], axis=-1)
        h = x @ params["w_share"].T + params["b_share"]
        cols = []
        for i in range(output_units_num):
            t = h @ params["w_fc"][i].T + params["b_fc"][i]
            cols.append(t @ params["w_out"][i].T + params["b_out"][i])
        return jnp.concatenate(cols, axis=-1)

    ref = ref_forward(feature, 0.0)
    assert jnp.allclose(pred, ref, atol=1e-4, rtol=1e-4)

    # exercise sigmoid + bf16-input path with a non-zero scalar d as well
    pred_sig = afse_forward(params, feature, d=0.1,
                            output_lr=False, sigmoid=True, use_bf16=True)
    jax.block_until_ready(pred_sig)
    assert pred_sig.shape == (B, output_units_num)

    print("KERNEL_OK")
</pallas_src>

<mosaic_0001>
module attributes {stable_mosaic.version = 11 : i64} {
  func.func @_afse_fused_kernel(%arg0: i32, %arg1: memref<8x32xf32, #tpu.memory_space<vmem>>, %arg2: memref<32x3xf32, #tpu.memory_space<vmem>>, %arg3: memref<1x3xf32, #tpu.memory_space<vmem>>, %arg4: memref<8x3xf32, #tpu.memory_space<vmem>>) attributes {dimension_semantics = [#tpu.dimension_semantics<parallel>], iteration_bounds = array<i64: 1>, scalar_prefetch = 0 : i64, scratch_operands = 0 : i64, tpu.core_type = #tpu.core_type<tc>, window_params = [{transform_indices = @transform_0, window_bounds = array<i64: 8, 32>}, {pipeline_mode = #tpu.pipeline_mode<synchronous>, transform_indices = @transform_1, window_bounds = array<i64: 32, 3>}, {pipeline_mode = #tpu.pipeline_mode<synchronous>, transform_indices = @transform_2, window_bounds = array<i64: 1, 3>}, {transform_indices = @transform_3, window_bounds = array<i64: 8, 3>}]} {
    %c0 = arith.constant 0 : index
    %c0_0 = arith.constant 0 : index
    %0 = vector.load %arg1[%c0, %c0_0] : memref<8x32xf32, #tpu.memory_space<vmem>>, vector<8x32xf32>
    %c0_1 = arith.constant 0 : index
    %c0_2 = arith.constant 0 : index
    %1 = vector.load %arg2[%c0_1, %c0_2] : memref<32x3xf32, #tpu.memory_space<vmem>>, vector<32x3xf32>
    %cst = arith.constant dense<0.000000e+00> : vector<8x3xf32>
    %2 = tpu.matmul %0, %1, %cst {dimension_numbers = #tpu.dot_dimension_numbers<[1], [0], [0], [1], [0, 0, 1, 1], [], []>} : vector<8x32xf32>, vector<32x3xf32>, vector<8x3xf32> -> vector<8x3xf32>
    %c0_3 = arith.constant 0 : index
    %c0_4 = arith.constant 0 : index
    %3 = vector.load %arg3[%c0_3, %c0_4] : memref<1x3xf32, #tpu.memory_space<vmem>>, vector<1x3xf32>
    %4 = vector.broadcast %3 : vector<1x3xf32> to vector<8x3xf32>
    %5 = arith.addf %2, %4 : vector<8x3xf32>
    %c0_5 = arith.constant 0 : index
    %c0_6 = arith.constant 0 : index
    %6 = vector.load %arg4[%c0_5, %c0_6] : memref<8x3xf32, #tpu.memory_space<vmem>>, vector<8x3xf32>
    tpu.vector_store %arg4[%c0_5, %c0_6], %5 {strides = array<i32>} : memref<8x3xf32, #tpu.memory_space<vmem>>, vector<8x3xf32>,
    return
  }
  func.func @transform_0(%arg0: i32) -> (i32, i32) {
    %c0_i32 = arith.constant 0 : i32
    %c0_i32_0 = arith.constant 0 : i32
    return %arg0, %c0_i32 : i32, i32
  }
  func.func @transform_1(%arg0: i32) -> (i32, i32) {
    %c0_i32 = arith.constant 0 : i32
    %c0_i32_0 = arith.constant 0 : i32
    %c0_i32_1 = arith.constant 0 : i32
    return %c0_i32, %c0_i32_0 : i32, i32
  }
  func.func @transform_2(%arg0: i32) -> (i32, i32) {
    %c0_i32 = arith.constant 0 : i32
    %c0_i32_0 = arith.constant 0 : i32
    %c0_i32_1 = arith.constant 0 : i32
    return %c0_i32, %c0_i32_0 : i32, i32
  }
  func.func @transform_3(%arg0: i32) -> (i32, i32) {
    %c0_i32 = arith.constant 0 : i32
    %c0_i32_0 = arith.constant 0 : i32
    return %arg0, %c0_i32 : i32, i32
  }
}

</mosaic_0001>

<llo_original>
// kernel: tpu_custom_call.1
$region0: #{tpu_custom_call.1}
  #allocation0 [shape = 'u32[]', space=smem, size = 0x4, offset = 0x4, fixed_abs, tag = 'smem constant byte address 0x4 - core index']
  #allocation1 [shape = 'u32[144,128]{1,0:T(1,128)}', space=vmem, size = 0x12000, scoped, tag = 'internal scratch']
  %s0 = inlined_call_operand.vmem [shape: f32[4,32], index: 0, kind: input, shape index: {}]
  %s1 = inlined_call_operand.vmem [shape: f32[32,3], index: 1, kind: input, shape index: {}]
  %s2 = inlined_call_operand.vmem [shape: f32[1,3], index: 2, kind: input, shape index: {}]
  %s3 = inlined_call_operand.hbm [shape: f32[4,3], index: 3, kind: output, shape index: {}]
  %s4 = sld [smem:[#allocation0]]
  $region22: #{tpu_custom_call.1} parent=0
    _
  %s6 = ssub.s32 1, %s4
  %s7 = scalar_select 0, %s6, %s4
  $region1: #{tpu_custom_call.1} parent=0
    #allocation2 [shape = 'u8[4096]{0}', space=vmem, size = 0x1000, scoped, tag = 'output window, operand 0, single buffered']
    #allocation3 [shape = 's32[1]{0}', space=sflag, size = 0x4, scoped, tag = 'scoped memory for tpu_custom_call.1']
    %8 = vsyncpa [#allocation3], 0
    // Predicated region
    $region2: #{tpu_custom_call.1} parent=1 // pred_check
      _
    $region3: #{tpu_custom_call.1} parent=1 // pred_check_branch
      %10 = sbr.rel (0) target = $region5
    $region4: #{tpu_custom_call.1} parent=1 // pred_region
      _
    $region5: #{tpu_custom_call.1} parent=1 // pred_fallthru
      _
    // Predicated region
    $region6: #{tpu_custom_call.1} parent=1 // pred_check
      _
    $region7: #{tpu_custom_call.1} parent=1 // pred_check_branch
      %12 = sbr.rel (0) target = $region9
    $region8: #{tpu_custom_call.1} parent=1 // pred_region
      _
    $region9: #{tpu_custom_call.1} parent=1 // pred_fallthru
      _
    // Predicated region
    $region10: #{tpu_custom_call.1} parent=1 // pred_check
      _
    $region11: #{tpu_custom_call.1} parent=1 // pred_check_branch
      %14 = sbr.rel (0) target = $region13
    $region12: #{tpu_custom_call.1} parent=1 // pred_region
      _
    $region13: #{tpu_custom_call.1} parent=1 // pred_fallthru
      _
    %v15 = vld [vmem:[%s0] sm:$0xff]
    %v16 = vld [vmem:[%s1] sm:$0xff]
    %v17 = vld [vmem:[%s1 + $0x8] sm:$0xff]
    %v18 = vld [vmem:[%s1 + $0x10] sm:$0xff]
    %v19 = vld [vmem:[%s1 + $0x18] sm:$0xff]
    %v20 = vld [vmem:[%s2] sm:$0x1]
    %v22 = vlaneseq
    %v23 = vshrl.u32 %v22, 7
    %v24 = vsub.s32 0, %v23
    %v25 = vrot.slane %v20, %v24
    %vm27 = vcmask 261120
    %v29 = vsel %vm27, %v15, 0
    %31 = vmatprep.subr.mxu0 0.0
    %32 = vmatpush1.msra.mxu0 0.0
    %33 = vmatprep.subr.mxu0 0.0
    %34 = vmatpush1.msra.mxu0 0.0
    %35 = vmatprep.subr.mxu0 0.0
    %36 = vmatpush1.msra.mxu0 0.0
    %37 = vmatprep.subr.mxu0 0.0
    %38 = vmatpush1.msra.mxu0 0.0
    %39 = vmatprep.subr.mxu0 0.0
    %40 = vmatpush1.msra.mxu0 0.0
    %41 = vmatprep.subr.mxu0 0.0
    %42 = vmatpush1.msra.mxu0 0.0
    %43 = vmatprep.subr.mxu0 0.0
    %44 = vmatpush1.msra.mxu0 0.0
    %45 = vmatprep.subr.mxu0 0.0
    %46 = vmatpush1.msra.mxu0 0.0
    %47 = vmatprep.subr.mxu0 0.0
    %48 = vmatpush1.msra.mxu0 0.0
    %49 = vmatprep.subr.mxu0 0.0
    %50 = vmatpush1.msra.mxu0 0.0
    %51 = vmatprep.subr.mxu0 0.0
    %52 = vmatpush1.msra.mxu0 0.0
    %53 = vmatprep.subr.mxu0 0.0
    %54 = vmatpush1.msra.mxu0 0.0
    %55 = vmatprep.subr.mxu0 0.0
    %56 = vmatpush1.msra.mxu0 %v19
    %57 = vmatprep.subr.mxu0 0.0
    %58 = vmatpush1.msra.mxu0 %v18
    %59 = vmatprep.subr.mxu0 0.0
    %60 = vmatpush1.msra.mxu0 %v17
    %61 = vmatprep.subr.mxu0 0.0
    %62 = vmatpush1.msra.mxu0 %v16
    %63 = vmatprep.subr.mxu0 0.0
    %64 = vmatpush2.msra.mxu0 0.0
    %65 = vmatprep.subr.mxu0 0.0
    %66 = vmatpush2.msra.mxu0 0.0
    %67 = vmatprep.subr.mxu0 0.0
    %68 = vmatpush2.msra.mxu0 0.0
    %69 = vmatprep.subr.mxu0 0.0
    %70 = vmatpush2.msra.mxu0 0.0
    %71 = vmatprep.subr.mxu0 0.0
    %72 = vmatpush2.msra.mxu0 0.0
    %73 = vmatprep.subr.mxu0 0.0
    %74 = vmatpush2.msra.mxu0 0.0
    %75 = vmatprep.subr.mxu0 0.0
    %76 = vmatpush2.msra.mxu0 0.0
    %77 = vmatprep.subr.mxu0 0.0
    %78 = vmatpush2.msra.mxu0 0.0
    %79 = vmatprep.subr.mxu0 0.0
    %80 = vmatpush2.msra.mxu0 0.0
    %81 = vmatprep.subr.mxu0 0.0
    %82 = vmatpush2.msra.mxu0 0.0
    %83 = vmatprep.subr.mxu0 0.0
    %84 = vmatpush2.msra.mxu0 0.0
    %85 = vmatprep.subr.mxu0 0.0
    %86 = vmatpush2.msra.mxu0 0.0
    %87 = vmatprep.subr.mxu0 0.0
    %88 = vmatpush2.msra.mxu0 0.0
    %89 = vmatprep.subr.mxu0 0.0
    %90 = vmatpush2.msra.mxu0 0.0
    %91 = vmatprep.subr.mxu0 0.0
    %92 = vmatpush2.msra.mxu0 0.0
    %93 = vmatprep.subr.mxu0 0.0
    %94 = vmatpush2.msra.mxu0 0.0
    %95 = vmatprep.mubr.f32.mxu0 0.0
    %96 = vmatmul.mubr.f32.gmra.mxu0 %v29
    %v97 = vpop.f32.mrf.mxu0
    %v98 = vadd.f32 %v25, %v97
    %v99 = vpop.f32.mrf.mxu0
    %100 = vdwg.mxu0
    %vm101 = vcmask 23552
    %102 = vst.msk [vmem:[#allocation2] sm:$0xff] %vm101, %v98
    // Predicated region
    $region14: #{tpu_custom_call.1} parent=1 // pred_check
      _
    $region15: #{tpu_custom_call.1} parent=1 // pred_check_branch
      %104 = sbr.rel (0) target = $region17
    $region16: #{tpu_custom_call.1} parent=1 // pred_region
      %s106 = ssub.s32 128, 64
      %107 = vsyncadd [#allocation3], %s106
      %s108 = sshll.u32 [#allocation2], 4
      %s109 = int_to_ptr.vmem [resolvable:$true] %s108
      %114 = dma.vmem_to_hbm [thread:$0]  %s109, 64, %s3, [#allocation3], 64, 64, 4
    $region17: #{tpu_custom_call.1} parent=1 // pred_fallthru
      _
    // Predicated region
    $region18: #{tpu_custom_call.1} parent=1 // pred_check
      _
    $region19: #{tpu_custom_call.1} parent=1 // pred_check_branch
      %116 = sbr.rel (0) target = $region21
    $region20: #{tpu_custom_call.1} parent=1 // pred_region
      %117 = dma.done [#allocation3], 128
    $region21: #{tpu_custom_call.1} parent=1 // pred_fallthru
      _
    %118 = vsyncpa [#allocation3], 1

</llo_original>
